<compile_context>
chip_gen: v5e
topology: v5e:2x2
jax: 0.10.0
libtpu: 0.0.40
codegen_flags: <defaults>
</compile_context>

<pallas_src>
import jax
import jax.numpy as jnp
from jax.experimental import pallas as pl
from jax.experimental.pallas import tpu as pltpu


def _round_up(x, m):
    return ((x + m - 1) // m) * m


def _linear_kernel(x_ref, w_ref, b_ref, o_ref, acc_ref):
    # x_ref: (tm, tk)  w_ref: (tk, tn)  b_ref: (1, tn)  o_ref/acc_ref: (tm, tn)
    k = pl.program_id(2)

    @pl.when(k == 0)
    def _():
        acc_ref[...] = jnp.zeros_like(acc_ref)

    acc_ref[...] += jnp.dot(x_ref[...], w_ref[...],
                            preferred_element_type=jnp.float32)

    @pl.when(k == pl.num_programs(2) - 1)
    def _():
        # Bias add + dtype cast only once, at reduction finalize.
        o_ref[...] = (acc_ref[...] + b_ref[...].astype(jnp.float32)
                      ).astype(o_ref.dtype)


def projection_layer(x, weight_t, bias, *, tm=256, tn=256, tk=512,
                     compute_dtype=None):
    """y = x @ weight_t + bias  (matches torch.nn.Linear(input_dim, output_dim)).

    x:        [..., input_dim]
    weight_t: [input_dim, output_dim]   (transpose of torch's weight)
    bias:     [output_dim]
    compute_dtype: optional dtype (e.g. jnp.bfloat16) for MXU operands on
      v6e/v7x; accumulation stays f32, output keeps x.dtype.
    """
    in_dim, out_dim = weight_t.shape
    assert x.shape[-1] == in_dim
    lead_shape = x.shape[:-1]
    out_dtype = x.dtype

    x2d = x.reshape(-1, in_dim)
    M = x2d.shape[0]

    if compute_dtype is not None:
        x2d = x2d.astype(compute_dtype)
        weight_t = weight_t.astype(compute_dtype)

    # Sublane granularity: 16 rows for 16-bit packed dtypes, 8 for 32-bit.
    row_gran = 16 if jnp.dtype(x2d.dtype).itemsize == 2 else 8

    # Clamp tiles to small dims; otherwise pad up to tile multiples.
    tm_eff = min(tm, _round_up(M, row_gran))
    m_pad = _round_up(M, tm_eff)
    tk_eff = tk if in_dim > tk else in_dim
    k_pad = _round_up(in_dim, tk_eff)
    tn_eff = tn if out_dim > tn else out_dim
    n_pad = _round_up(out_dim, tn_eff)

    if m_pad != M or k_pad != in_dim:
        x2d = jnp.pad(x2d, ((0, m_pad - M), (0, k_pad - in_dim)))
    if k_pad != in_dim or n_pad != out_dim:
        weight_t = jnp.pad(weight_t, ((0, k_pad - in_dim), (0, n_pad - out_dim)))

    bias2d = bias.reshape(1, out_dim).astype(jnp.float32)
    if n_pad != out_dim:
        bias2d = jnp.pad(bias2d, ((0, 0), (0, n_pad - out_dim)))

    grid = (m_pad // tm_eff, n_pad // tn_eff, k_pad // tk_eff)

    x_bytes = x2d.size * x2d.dtype.itemsize
    w_bytes = weight_t.size * weight_t.dtype.itemsize
    cost = pl.CostEstimate(
        flops=2 * M * in_dim * out_dim,
        transcendentals=0,
        bytes_accessed=(x_bytes * grid[1] + w_bytes * grid[0]
                        + bias2d.size * 4
                        + m_pad * n_pad * jnp.dtype(out_dtype).itemsize),
    )

    out2d = pl.pallas_call(
        _linear_kernel,
        out_shape=jax.ShapeDtypeStruct((m_pad, n_pad), out_dtype),
        grid_spec=pltpu.PrefetchScalarGridSpec(
            num_scalar_prefetch=0,
            grid=grid,
            in_specs=[
                pl.BlockSpec((tm_eff, tk_eff), lambda i, j, k: (i, k)),
                pl.BlockSpec((tk_eff, tn_eff), lambda i, j, k: (k, j)),
                pl.BlockSpec((1, tn_eff), lambda i, j, k: (0, j)),
            ],
            out_specs=pl.BlockSpec((tm_eff, tn_eff), lambda i, j, k: (i, j)),
            scratch_shapes=[pltpu.VMEM((tm_eff, tn_eff), jnp.float32)],
        ),
        compiler_params=pltpu.CompilerParams(
            dimension_semantics=("parallel", "parallel", "arbitrary"),
            vmem_limit_bytes=48 * 1024 * 1024,  # safe headroom on v7x (64 MiB)
        ),
        cost_estimate=cost,
    )(x2d, weight_t, bias2d)

    out2d = out2d[:M, :out_dim]
    return out2d.reshape(*lead_shape, out_dim)


if __name__ == "__main__":
    key = jax.random.PRNGKey(0)

    # --- Small shapes consistent with the module: batch=2, seq=8, in=32, out=64.
    batch, seq, input_dim, output_dim = 2, 8, 32, 64
    k_x, k_w, k_b, k2_x, k2_w, k2_b = jax.random.split(key, 6)

    x = jax.random.normal(k_x, (batch, seq, input_dim), dtype=jnp.float32)
    weight_t = jax.random.normal(k_w, (input_dim, output_dim),
                                 dtype=jnp.float32) * 0.05
    bias = jax.random.normal(k_b, (output_dim,), dtype=jnp.float32) * 0.05

    y = projection_layer(x, weight_t, bias)
    y = jax.block_until_ready(y)
    y_ref = x @ weight_t + bias
    assert y.shape == (batch, seq, output_dim)
    assert jnp.allclose(y, y_ref, atol=1e-5, rtol=1e-5)

    # --- Second check exercising the tiled / padded path (multi-tile M, N, K
    # grid plus K padding), with small tiles to keep it quick.
    b2, s2, d_in2, d_out2 = 4, 96, 640, 384
    x2 = jax.random.normal(k2_x, (b2, s2, d_in2), dtype=jnp.float32)
    w2 = jax.random.normal(k2_w, (d_in2, d_out2), dtype=jnp.float32) * 0.05
    bias2 = jax.random.normal(k2_b, (d_out2,), dtype=jnp.float32) * 0.05

    y2 = projection_layer(x2, w2, bias2, tm=128, tn=128, tk=256)
    y2 = jax.block_until_ready(y2)
    y2_ref = x2 @ w2 + bias2
    assert y2.shape == (b2, s2, d_out2)
    assert jnp.allclose(y2, y2_ref, atol=2e-2, rtol=2e-2)

    print("KERNEL_OK")
</pallas_src>

<mosaic_0001>
module attributes {stable_mosaic.version = 11 : i64} {
  func.func @_linear_kernel(%arg0: i32, %arg1: i32, %arg2: i32, %arg3: memref<16x32xf32, #tpu.memory_space<vmem>>, %arg4: memref<32x64xf32, #tpu.memory_space<vmem>>, %arg5: memref<1x64xf32, #tpu.memory_space<vmem>>, %arg6: memref<16x64xf32, #tpu.memory_space<vmem>>, %arg7: memref<16x64xf32, #tpu.memory_space<vmem>>) attributes {dimension_semantics = [#tpu.dimension_semantics<parallel>, #tpu.dimension_semantics<parallel>, #tpu.dimension_semantics<arbitrary>], iteration_bounds = array<i64: 1, 1, 1>, scalar_prefetch = 0 : i64, scratch_operands = 1 : i64, tpu.core_type = #tpu.core_type<tc>, window_params = [{transform_indices = @transform_0, window_bounds = array<i64: 16, 32>}, {transform_indices = @transform_1, window_bounds = array<i64: 32, 64>}, {transform_indices = @transform_2, window_bounds = array<i64: 1, 64>}, {transform_indices = @transform_3, window_bounds = array<i64: 16, 64>}]} {
    %c0_i32 = arith.constant 0 : i32
    %0 = arith.cmpi eq, %arg2, %c0_i32 : i32
    %1 = arith.extui %0 : i1 to i32
    %c0_i32_0 = arith.constant 0 : i32
    %2 = arith.cmpi ne, %1, %c0_i32_0 : i32
    scf.if %2 {
      %cst_10 = arith.constant 0.000000e+00 : f32
      %12 = vector.broadcast %cst_10 : f32 to vector<16x64xf32>
      %c0_11 = arith.constant 0 : index
      %c0_12 = arith.constant 0 : index
      %13 = vector.load %arg7[%c0_11, %c0_12] : memref<16x64xf32, #tpu.memory_space<vmem>>, vector<16x64xf32>
      tpu.vector_store %arg7[%c0_11, %c0_12], %12 {strides = array<i32>} : memref<16x64xf32, #tpu.memory_space<vmem>>, vector<16x64xf32>,
    } else {
    }
    %c0 = arith.constant 0 : index
    %c0_1 = arith.constant 0 : index
    %3 = vector.load %arg7[%c0, %c0_1] : memref<16x64xf32, #tpu.memory_space<vmem>>, vector<16x64xf32>
    %c0_2 = arith.constant 0 : index
    %c0_3 = arith.constant 0 : index
    %4 = vector.load %arg3[%c0_2, %c0_3] : memref<16x32xf32, #tpu.memory_space<vmem>>, vector<16x32xf32>
    %c0_4 = arith.constant 0 : index
    %c0_5 = arith.constant 0 : index
    %5 = vector.load %arg4[%c0_4, %c0_5] : memref<32x64xf32, #tpu.memory_space<vmem>>, vector<32x64xf32>
    %cst = arith.constant dense<0.000000e+00> : vector<16x64xf32>
    %6 = tpu.matmul %4, %5, %cst {dimension_numbers = #tpu.dot_dimension_numbers<[1], [0], [0], [1], [0, 0, 1, 1], [], []>} : vector<16x32xf32>, vector<32x64xf32>, vector<16x64xf32> -> vector<16x64xf32>
    %7 = arith.addf %3, %6 : vector<16x64xf32>
    %c0_6 = arith.constant 0 : index
    %c0_7 = arith.constant 0 : index
    %8 = vector.load %arg7[%c0_6, %c0_7] : memref<16x64xf32, #tpu.memory_space<vmem>>, vector<16x64xf32>
    tpu.vector_store %arg7[%c0_6, %c0_7], %7 {strides = array<i32>} : memref<16x64xf32, #tpu.memory_space<vmem>>, vector<16x64xf32>,
    %c0_i32_8 = arith.constant 0 : i32
    %9 = arith.cmpi eq, %arg2, %c0_i32_8 : i32
    %10 = arith.extui %9 : i1 to i32
    %c0_i32_9 = arith.constant 0 : i32
    %11 = arith.cmpi ne, %10, %c0_i32_9 : i32
    scf.if %11 {
      %c0_10 = arith.constant 0 : index
      %c0_11 = arith.constant 0 : index
      %12 = vector.load %arg7[%c0_10, %c0_11] : memref<16x64xf32, #tpu.memory_space<vmem>>, vector<16x64xf32>
      %c0_12 = arith.constant 0 : index
      %c0_13 = arith.constant 0 : index
      %13 = vector.load %arg5[%c0_12, %c0_13] : memref<1x64xf32, #tpu.memory_space<vmem>>, vector<1x64xf32>
      %14 = vector.broadcast %13 : vector<1x64xf32> to vector<16x64xf32>
      %15 = arith.addf %12, %14 : vector<16x64xf32>
      %c0_14 = arith.constant 0 : index
      %c0_15 = arith.constant 0 : index
      %16 = vector.load %arg6[%c0_14, %c0_15] : memref<16x64xf32, #tpu.memory_space<vmem>>, vector<16x64xf32>
      tpu.vector_store %arg6[%c0_14, %c0_15], %15 {strides = array<i32>} : memref<16x64xf32, #tpu.memory_space<vmem>>, vector<16x64xf32>,
    } else {
    }
    return
  }
  func.func @transform_0(%arg0: i32, %arg1: i32, %arg2: i32) -> (i32, i32) {
    %c0_i32 = arith.constant 0 : i32
    return %arg0, %arg2 : i32, i32
  }
  func.func @transform_1(%arg0: i32, %arg1: i32, %arg2: i32) -> (i32, i32) {
    %c0_i32 = arith.constant 0 : i32
    return %arg2, %arg1 : i32, i32
  }
  func.func @transform_2(%arg0: i32, %arg1: i32, %arg2: i32) -> (i32, i32) {
    %c0_i32 = arith.constant 0 : i32
    %c0_i32_0 = arith.constant 0 : i32
    return %c0_i32, %arg1 : i32, i32
  }
  func.func @transform_3(%arg0: i32, %arg1: i32, %arg2: i32) -> (i32, i32) {
    %c0_i32 = arith.constant 0 : i32
    return %arg0, %arg1 : i32, i32
  }
}

</mosaic_0001>

<llo_original>
// kernel: tpu_custom_call.1
$region0: #{tpu_custom_call.1}
  #allocation0 [shape = 'u32[]', space=smem, size = 0x4, offset = 0x4, fixed_abs, tag = 'smem constant byte address 0x4 - core index']
  #allocation1 [shape = 'u32[72,128]{1,0:T(1,128)}', space=vmem, size = 0x9000, scoped, tag = 'internal scratch']
  #allocation2 [shape = 'f32[16,64]{1,0:T(8,128)}', space=vmem, size = 0x2000, scoped, tag = 'scratch operand']
  %s0 = inlined_call_operand.hbm [shape: f32[16,32], index: 0, kind: input, shape index: {}]
  %s1 = inlined_call_operand.hbm [shape: f32[32,64], index: 1, kind: input, shape index: {}]
  %s2 = inlined_call_operand.vmem [shape: f32[1,64], index: 2, kind: input, shape index: {}]
  %s3 = inlined_call_operand.hbm [shape: f32[16,64], index: 3, kind: output, shape index: {}]
  %s4 = sld [smem:[#allocation0]]
  $region38: #{tpu_custom_call.1} parent=0
    _
  %s6 = ssub.s32 1, %s4
  %s7 = scalar_select 0, %s6, %s4
  $region1: #{tpu_custom_call.1} parent=0
    #allocation3 [shape = 'u8[8192]{0}', space=vmem, size = 0x2000, scoped, tag = 'input window, operand 0, single buffered']
    #allocation4 [shape = 's32[1]{0}', space=sflag, size = 0x4, scoped, tag = 'scoped memory for tpu_custom_call.1']
    #allocation5 [shape = 's32[1]{0}', space=sflag, size = 0x4, scoped, tag = 'scoped memory for tpu_custom_call.1']
    #allocation6 [shape = 'u8[16384]{0}', space=vmem, size = 0x4000, scoped, tag = 'input window, operand 1, single buffered']
    #allocation7 [shape = 's32[1]{0}', space=sflag, size = 0x4, scoped, tag = 'scoped memory for tpu_custom_call.1']
    #allocation8 [shape = 'u8[8192]{0}', space=vmem, size = 0x2000, scoped, tag = 'output window, operand 0, single buffered']
    %8 = vsyncpa [#allocation4], 0
    %9 = vsyncpa [#allocation7], 0
    %10 = vsyncpa [#allocation5], 0
    // Predicated region
    $region2: #{tpu_custom_call.1} parent=1 // pred_check
      _
    $region3: #{tpu_custom_call.1} parent=1 // pred_check_branch
      %12 = sbr.rel (0) target = $region5
    $region4: #{tpu_custom_call.1} parent=1 // pred_region
      %14 = vsyncadd [#allocation4], 0
      %s15 = sshll.u32 %s0, 4
      %s16 = int_to_ptr.hbm [resolvable:$true] %s15
      %s17 = sshll.u32 [#allocation3], 4
      %s18 = int_to_ptr.vmem [resolvable:$true] %s17
      %23 = dma.hbm_to_vmem [thread:$0]  %s16, 256, %s18, [#allocation4], 128, 128, 8
    $region5: #{tpu_custom_call.1} parent=1 // pred_fallthru
      _
    // Predicated region
    $region6: #{tpu_custom_call.1} parent=1 // pred_check
      _
    $region7: #{tpu_custom_call.1} parent=1 // pred_check_branch
      %25 = sbr.rel (0) target = $region9
    $region8: #{tpu_custom_call.1} parent=1 // pred_region
      %27 = vsyncadd [#allocation7], 0
      %s28 = sshll.u32 %s1, 4
      %s29 = int_to_ptr.hbm [resolvable:$true] %s28
      %s30 = sshll.u32 [#allocation6], 4
      %s31 = int_to_ptr.vmem [resolvable:$true] %s30
      %36 = dma.hbm_to_vmem [thread:$0]  %s29, 512, %s31, [#allocation7], 128, 128, 8
    $region9: #{tpu_custom_call.1} parent=1 // pred_fallthru
      _
    // Predicated region
    $region10: #{tpu_custom_call.1} parent=1 // pred_check
      _
    $region11: #{tpu_custom_call.1} parent=1 // pred_check_branch
      %38 = sbr.rel (0) target = $region13
    $region12: #{tpu_custom_call.1} parent=1 // pred_region
      _
    $region13: #{tpu_custom_call.1} parent=1 // pred_fallthru
      _
    // Predicated region
    $region14: #{tpu_custom_call.1} parent=1 // pred_check
      _
    $region15: #{tpu_custom_call.1} parent=1 // pred_check_branch
      %40 = sbr.rel (0) target = $region17
    $region16: #{tpu_custom_call.1} parent=1 // pred_region
      %42 = dma.done [#allocation4], 256
    $region17: #{tpu_custom_call.1} parent=1 // pred_fallthru
      _
    // Predicated region
    $region18: #{tpu_custom_call.1} parent=1 // pred_check
      _
    $region19: #{tpu_custom_call.1} parent=1 // pred_check_branch
      %44 = sbr.rel (0) target = $region21
    $region20: #{tpu_custom_call.1} parent=1 // pred_region
      %46 = dma.done [#allocation7], 512
    $region21: #{tpu_custom_call.1} parent=1 // pred_fallthru
      _
    %p47 = scmp.eq.s32.totalorder 0, 0
    // Predicated region
    $region22: #{tpu_custom_call.1} parent=1 // pred_check
      %p48 = pneg %p47
    $region23: #{tpu_custom_call.1} parent=1 // pred_check_branch
      %50 = sbr.rel (%p48) target = $region25
    $region24: #{tpu_custom_call.1} parent=1 // pred_region
      %vm51 = vcmask 523264
      %52 = vst.msk [vmem:[#allocation2] sm:$0xff] %vm51, 0.0
      %53 = vst.msk [vmem:[#allocation2 + $0x8] sm:$0xff] %vm51, 0.0
    $region25: #{tpu_custom_call.1} parent=1 // pred_fallthru
      _
    %v54 = vld [vmem:[#allocation2] sm:$0xff]
    %v55 = vld [vmem:[#allocation2 + $0x8] sm:$0xff]
    %v56 = vld [vmem:[#allocation3] sm:$0xff]
    %v57 = vld [vmem:[#allocation3 + $0x8] sm:$0xff]
    %v58 = vld [vmem:[#allocation6] sm:$0xff]
    %v59 = vld [vmem:[#allocation6 + $0x8] sm:$0xff]
    %v60 = vld [vmem:[#allocation6 + $0x10] sm:$0xff]
    %v61 = vld [vmem:[#allocation6 + $0x18] sm:$0xff]
    %vm62 = vcmask 261120
    %v64 = vsel %vm62, %v56, 0
    %v67 = vsel %vm62, %v57, 0
    %69 = vmatpush.msra.mxu0 0.0
    %70 = vmatpush.msra.mxu0 0.0
    %71 = vmatpush.msra.mxu0 0.0
    %72 = vmatpush.msra.mxu0 0.0
    %73 = vmatpush.msra.mxu0 0.0
    %74 = vmatpush.msra.mxu0 0.0
    %75 = vmatpush.msra.mxu0 0.0
    %76 = vmatpush.msra.mxu0 0.0
    %77 = vmatpush.msra.mxu0 0.0
    %78 = vmatpush.msra.mxu0 0.0
    %79 = vmatpush.msra.mxu0 0.0
    %80 = vmatpush.msra.mxu0 0.0
    %81 = vmatpush.msra.mxu0 %v61
    %82 = vmatpush.msra.mxu0 %v60
    %83 = vmatpush.msra.mxu0 %v59
    %84 = vmatpush.msra.mxu0 %v58
    %85 = vmatmul.f32.gmra.mxu0 %v64
    %v86 = vpop.f32.mrf.mxu0
    %v87 = vadd.f32 0.0, %v86
    %88 = vmatmul.f32.gmra.mxu0 %v67
    %v89 = vpop.f32.mrf.mxu0
    %v90 = vadd.f32 0.0, %v89
    %91 = vdwg.mxu0
    %v92 = vadd.f32 %v54, %v87
    %v93 = vadd.f32 %v55, %v90
    %vm94 = vcmask 523264
    %95 = vst.msk [vmem:[#allocation2] sm:$0xff] %vm94, %v92
    %96 = vst.msk [vmem:[#allocation2 + $0x8] sm:$0xff] %vm94, %v93
    // Predicated region
    $region26: #{tpu_custom_call.1} parent=1 // pred_check
      %p97 = pneg %p47
    $region27: #{tpu_custom_call.1} parent=1 // pred_check_branch
      %99 = sbr.rel (%p97) target = $region29
    $region28: #{tpu_custom_call.1} parent=1 // pred_region
      %v100 = vld [vmem:[#allocation2] sm:$0xff]
      %v101 = vld [vmem:[#allocation2 + $0x8] sm:$0xff]
      %v102 = vld [vmem:[%s2] sm:$0x1]
      %v104 = vperm.slane %v102, 0
      %v106 = vadd.f32 %v100, %v104
      %v107 = vadd.f32 %v101, %v104
      %108 = vst.msk [vmem:[#allocation8] sm:$0xff] %vm94, %v106
      %109 = vst.msk [vmem:[#allocation8 + $0x8] sm:$0xff] %vm94, %v107
    $region29: #{tpu_custom_call.1} parent=1 // pred_fallthru
      _
    // Predicated region
    $region30: #{tpu_custom_call.1} parent=1 // pred_check
      _
    $region31: #{tpu_custom_call.1} parent=1 // pred_check_branch
      %111 = sbr.rel (0) target = $region33
    $region32: #{tpu_custom_call.1} parent=1 // pred_region
      %113 = vsyncadd [#allocation5], 0
      %s114 = sshll.u32 [#allocation8], 4
      %s115 = int_to_ptr.vmem [resolvable:$true] %s114
      %s116 = sshll.u32 %s3, 4
      %s117 = int_to_ptr.hbm [resolvable:$true] %s116
      %122 = dma.vmem_to_hbm [thread:$0]  %s115, 256, %s117, [#allocation5], 128, 128, 8
    $region33: #{tpu_custom_call.1} parent=1 // pred_fallthru
      _
    // Predicated region
    $region34: #{tpu_custom_call.1} parent=1 // pred_check
      _
    $region35: #{tpu_custom_call.1} parent=1 // pred_check_branch
      %124 = sbr.rel (0) target = $region37
    $region36: #{tpu_custom_call.1} parent=1 // pred_region
      %126 = dma.done [#allocation5], 256
    $region37: #{tpu_custom_call.1} parent=1 // pred_fallthru
      _
    %127 = vsyncpa [#allocation4], 1
    %128 = vsyncpa [#allocation7], 1
    %129 = vsyncpa [#allocation5], 1

</llo_original>
